<compile_context>
chip_gen: v6e
topology: v6e:2x2x1
jax: 0.10.0
libtpu: 0.0.40
codegen_flags: <defaults>
</compile_context>

<pallas_src>
import functools

import jax
import jax.numpy as jnp
from jax.experimental import pallas as pl
from jax.experimental.pallas import tpu as pltpu

_LANE = 128
_SUBLANE = 8
_VMEM_BUDGET = 48 * 1024 * 1024    # conservative working budget (v5e/v6e/v7x)
_VMEM_CEILING = 64 * 1024 * 1024   # v7x physical VMEM per TensorCore


def _round_up(n, m):
    return ((n + m - 1) // m) * m


def _cdiv(a, b):
    return -(-a // b)


def _ae_kernel(x_ref, w1_ref, b1_ref, w2_ref, b2_ref, ae_ref, de_ref):
    # Encoder: Linear(input_num -> output_num) + ReLU. MXU matmul, f32 accumulate.
    x = x_ref[...]
    h = jnp.dot(x, w1_ref[...], preferred_element_type=jnp.float32)
    h = jnp.maximum(h + b1_ref[...], 0.0)               # bias add + ReLU in f32
    ae_ref[...] = h.astype(ae_ref.dtype)
    # Decoder: Linear(output_num -> input_num) + ReLU.
    d = jnp.dot(h.astype(w2_ref.dtype), w2_ref[...],
                preferred_element_type=jnp.float32)
    d = jnp.maximum(d + b2_ref[...], 0.0)
    de_ref[...] = d.astype(de_ref.dtype)


def prepare_ae_params(w_enc, b_enc, w_dec, b_dec, compute_dtype=jnp.bfloat16):
    """One-time parameter prep: transpose PyTorch (out,in) weights to (in,out),
    cast to the MXU-native compute dtype (bf16 by default), and zero-pad the
    feature dims up to a multiple of 128 (lane-dense).

    Padding is mathematically transparent: padded K rows of w1/w2 are zero, so
    whatever sits in the padded columns of x / the latent contributes nothing;
    padded hidden/output channels are ReLU(0 + 0) = 0 and are sliced off.
    Biases stay in f32 (bias add / ReLU run in f32 inside the kernel).
    """
    output_num, input_num = w_enc.shape
    ip = _round_up(input_num, _LANE)
    op = _round_up(output_num, _LANE)

    w1 = jnp.zeros((ip, op), compute_dtype)
    w1 = w1.at[:input_num, :output_num].set(jnp.asarray(w_enc, compute_dtype).T)
    b1 = jnp.zeros((1, op), jnp.float32)
    b1 = b1.at[0, :output_num].set(jnp.asarray(b_enc, jnp.float32))

    w2 = jnp.zeros((op, ip), compute_dtype)
    w2 = w2.at[:output_num, :input_num].set(jnp.asarray(w_dec, compute_dtype).T)
    b2 = jnp.zeros((1, ip), jnp.float32)
    b2 = b2.at[0, :input_num].set(jnp.asarray(b_dec, jnp.float32))

    return w1, b1, w2, b2


def _choose_batch_tile(B, block_batch, bytes_per_row, resident_bytes):
    # Balance the tile across cdiv(B, block_batch) steps to minimize last-tile
    # waste (e.g. B=264 -> tb=136, not 256+8 garbage rows).
    nsteps = max(1, _cdiv(B, block_batch))
    tb = _round_up(_cdiv(B, nsteps), _SUBLANE)
    tb = min(tb, max(_SUBLANE, _round_up(block_batch, _SUBLANE)))
    # v7x megacore: make sure there are >=2 grid steps when the batch allows,
    # so dimension_semantics=("parallel",) can shard work across both TCs.
    if _cdiv(B, tb) < 2 and tb > _SUBLANE:
        tb = _round_up(_cdiv(tb, 2), _SUBLANE)
    # Shrink until resident weights + double-buffered x/ae/de tiles fit budget.
    while tb > _SUBLANE and resident_bytes + 2 * tb * bytes_per_row > _VMEM_BUDGET:
        tb = _round_up(_cdiv(tb, 2), _SUBLANE)
    return tb


def _ae_forward_impl(x, w1, b1, w2, b2, input_num, output_num, block_batch,
                     out_dtype, single_buffer_weights):
    B = x.shape[0]
    ip, op = w1.shape                      # padded feature dims (multiples of 128)
    cd = w1.dtype                          # compute dtype (bf16 by default)
    out_dtype = jnp.dtype(out_dtype)

    w_isz = jnp.dtype(cd).itemsize
    o_isz = out_dtype.itemsize
    weight_bufs = 1 if single_buffer_weights else 2
    resident = weight_bufs * (2 * ip * op * w_isz + (ip + op) * 4)   # w1,w2,b1,b2
    per_row = ip * w_isz + (op + ip) * o_isz                         # x + ae + de

    tb = _choose_batch_tile(B, block_batch, per_row, resident)
    nb = _cdiv(B, tb)

    # Lane-pad only the feature axis, only when needed; never pad the batch.
    xc = x.astype(cd)
    if ip != input_num:
        xc = jnp.pad(xc, ((0, 0), (0, ip - input_num)))

    vmem_needed = resident + 2 * tb * per_row
    vmem_limit = min(max(int(vmem_needed * 1.25) + (4 << 20), 16 << 20),
                     _VMEM_CEILING)

    if single_buffer_weights:
        def wspec(shape):
            return pl.BlockSpec(shape, lambda i: (0, 0),
                                pipeline_mode=pl.Buffered(1))
    else:
        def wspec(shape):
            return pl.BlockSpec(shape, lambda i: (0, 0))

    ae_p, de_p = pl.pallas_call(
        _ae_kernel,
        out_shape=(
            jax.ShapeDtypeStruct((B, op), out_dtype),
            jax.ShapeDtypeStruct((B, ip), out_dtype),
        ),
        grid=(nb,),
        in_specs=[
            pl.BlockSpec((tb, ip), lambda i: (i, 0)),   # x: tiled over batch
            wspec((ip, op)),                            # w1: resident
            wspec((1, op)),                             # b1
            wspec((op, ip)),                            # w2: resident
            wspec((1, ip)),                             # b2
        ],
        out_specs=(
            pl.BlockSpec((tb, op), lambda i: (i, 0)),
            pl.BlockSpec((tb, ip), lambda i: (i, 0)),
        ),
        compiler_params=pltpu.CompilerParams(
            dimension_semantics=("parallel",),          # both TCs on v7x
            vmem_limit_bytes=vmem_limit,
        ),
    )(xc, w1, b1, w2, b2)

    # Slice feature-dim padding back off (batch was never padded).
    return ae_p[:, :output_num], de_p[:, :input_num]


_ae_forward_jit = jax.jit(_ae_forward_impl, static_argnums=(5, 6, 7, 8, 9))


def ae_forward(x, w1, b1, w2, b2, input_num, output_num, block_batch=1024,
               out_dtype=None):
    """Fused AE forward. Returns (x_ae, x_de) with logical (unpadded) shapes."""
    if out_dtype is None:
        out_dtype = x.dtype            # preserve the module's output dtype
    out_name = jnp.dtype(out_dtype).name
    try:
        return _ae_forward_jit(x, w1, b1, w2, b2, input_num, output_num,
                               block_batch, out_name, True)
    except Exception:
        # Fallback for jax builds that reject pl.Buffered(1) on resident blocks.
        return _ae_forward_jit(x, w1, b1, w2, b2, input_num, output_num,
                               block_batch, out_name, False)


def xavier_uniform(key, out_features, in_features):
    # torch.nn.init.xavier_uniform_: U(-a, a), a = sqrt(6 / (fan_in + fan_out))
    bound = (6.0 / (in_features + out_features)) ** 0.5
    return jax.random.uniform(
        key, (out_features, in_features), jnp.float32, minval=-bound, maxval=bound
    )


if __name__ == "__main__":
    input_num = 32
    output_num = 16
    batch = 8

    key = jax.random.PRNGKey(0)
    k_x, k_we, k_wd = jax.random.split(key, 3)

    x = jax.random.normal(k_x, (batch, input_num), jnp.float32)

    # Deterministic parameter init mirroring the module's __init__.
    w_enc = xavier_uniform(k_we, output_num, input_num)   # encoder Linear weight
    b_enc = jnp.zeros((output_num,), jnp.float32)         # bias = 0
    w_dec = xavier_uniform(k_wd, input_num, output_num)   # decoder Linear weight
    b_dec = jnp.zeros((input_num,), jnp.float32)          # bias = 0

    # One-time prep: transpose, bf16 cast, 128-lane zero padding.
    w1, b1, w2, b2 = prepare_ae_params(w_enc, b_enc, w_dec, b_dec)

    x_ae, x_de = ae_forward(x, w1, b1, w2, b2, input_num, output_num)
    jax.block_until_ready((x_ae, x_de))

    # Reference check in plain JAX (same math as the PyTorch forward, f32).
    ref_ae = jnp.maximum(x @ w_enc.T + b_enc, 0.0)
    ref_de = jnp.maximum(ref_ae @ w_dec.T + b_dec, 0.0)
    assert x_ae.shape == (batch, output_num) and x_de.shape == (batch, input_num)
    # bf16 weights/activations on the MXU => loosened tolerance vs. the f32 ref.
    assert jnp.allclose(x_ae, ref_ae, atol=5e-2, rtol=5e-2), "encoder mismatch"
    assert jnp.allclose(x_de, ref_de, atol=5e-2, rtol=5e-2), "decoder mismatch"

    print("KERNEL_OK")
</pallas_src>

<mosaic_0001>
module attributes {stable_mosaic.version = 11 : i64} {
  func.func @_ae_kernel(%arg0: i32, %arg1: memref<8x128xbf16, #tpu.memory_space<vmem>>, %arg2: memref<128x128xbf16, #tpu.memory_space<vmem>>, %arg3: memref<1x128xf32, #tpu.memory_space<vmem>>, %arg4: memref<128x128xbf16, #tpu.memory_space<vmem>>, %arg5: memref<1x128xf32, #tpu.memory_space<vmem>>, %arg6: memref<8x128xf32, #tpu.memory_space<vmem>>, %arg7: memref<8x128xf32, #tpu.memory_space<vmem>>) attributes {dimension_semantics = [#tpu.dimension_semantics<parallel>], iteration_bounds = array<i64: 1>, scalar_prefetch = 0 : i64, scratch_operands = 0 : i64, tpu.core_type = #tpu.core_type<tc>, window_params = [{transform_indices = @transform_0, window_bounds = array<i64: 8, 128>}, {pipeline_mode = #tpu.pipeline_mode<synchronous>, transform_indices = @transform_1, window_bounds = array<i64: 128, 128>}, {pipeline_mode = #tpu.pipeline_mode<synchronous>, transform_indices = @transform_2, window_bounds = array<i64: 1, 128>}, {pipeline_mode = #tpu.pipeline_mode<synchronous>, transform_indices = @transform_3, window_bounds = array<i64: 128, 128>}, {pipeline_mode = #tpu.pipeline_mode<synchronous>, transform_indices = @transform_4, window_bounds = array<i64: 1, 128>}, {transform_indices = @transform_5, window_bounds = array<i64: 8, 128>}, {transform_indices = @transform_6, window_bounds = array<i64: 8, 128>}]} {
    %c0 = arith.constant 0 : index
    %c0_0 = arith.constant 0 : index
    %0 = vector.load %arg1[%c0, %c0_0] : memref<8x128xbf16, #tpu.memory_space<vmem>>, vector<8x128xbf16>
    %c0_1 = arith.constant 0 : index
    %c0_2 = arith.constant 0 : index
    %1 = vector.load %arg2[%c0_1, %c0_2] : memref<128x128xbf16, #tpu.memory_space<vmem>>, vector<128x128xbf16>
    %cst = arith.constant dense<0.000000e+00> : vector<8x128xf32>
    %2 = tpu.matmul %0, %1, %cst {dimension_numbers = #tpu.dot_dimension_numbers<[1], [0], [0], [1], [0, 0, 1, 1], [], []>} : vector<8x128xbf16>, vector<128x128xbf16>, vector<8x128xf32> -> vector<8x128xf32>
    %c0_3 = arith.constant 0 : index
    %c0_4 = arith.constant 0 : index
    %3 = vector.load %arg3[%c0_3, %c0_4] : memref<1x128xf32, #tpu.memory_space<vmem>>, vector<1x128xf32>
    %4 = vector.broadcast %3 : vector<1x128xf32> to vector<8x128xf32>
    %5 = arith.addf %2, %4 : vector<8x128xf32>
    %cst_5 = arith.constant 0.000000e+00 : f32
    %6 = vector.broadcast %cst_5 : f32 to vector<8x128xf32>
    %7 = arith.maximumf %5, %6 : vector<8x128xf32>
    %c0_6 = arith.constant 0 : index
    %c0_7 = arith.constant 0 : index
    %8 = vector.load %arg6[%c0_6, %c0_7] : memref<8x128xf32, #tpu.memory_space<vmem>>, vector<8x128xf32>
    tpu.vector_store %arg6[%c0_6, %c0_7], %7 {strides = array<i32>} : memref<8x128xf32, #tpu.memory_space<vmem>>, vector<8x128xf32>,
    %9 = arith.truncf %7 : vector<8x128xf32> to vector<8x128xbf16>
    %c0_8 = arith.constant 0 : index
    %c0_9 = arith.constant 0 : index
    %10 = vector.load %arg4[%c0_8, %c0_9] : memref<128x128xbf16, #tpu.memory_space<vmem>>, vector<128x128xbf16>
    %cst_10 = arith.constant dense<0.000000e+00> : vector<8x128xf32>
    %11 = tpu.matmul %9, %10, %cst_10 {dimension_numbers = #tpu.dot_dimension_numbers<[1], [0], [0], [1], [0, 0, 1, 1], [], []>} : vector<8x128xbf16>, vector<128x128xbf16>, vector<8x128xf32> -> vector<8x128xf32>
    %c0_11 = arith.constant 0 : index
    %c0_12 = arith.constant 0 : index
    %12 = vector.load %arg5[%c0_11, %c0_12] : memref<1x128xf32, #tpu.memory_space<vmem>>, vector<1x128xf32>
    %13 = vector.broadcast %12 : vector<1x128xf32> to vector<8x128xf32>
    %14 = arith.addf %11, %13 : vector<8x128xf32>
    %cst_13 = arith.constant 0.000000e+00 : f32
    %15 = vector.broadcast %cst_13 : f32 to vector<8x128xf32>
    %16 = arith.maximumf %14, %15 : vector<8x128xf32>
    %c0_14 = arith.constant 0 : index
    %c0_15 = arith.constant 0 : index
    %17 = vector.load %arg7[%c0_14, %c0_15] : memref<8x128xf32, #tpu.memory_space<vmem>>, vector<8x128xf32>
    tpu.vector_store %arg7[%c0_14, %c0_15], %16 {strides = array<i32>} : memref<8x128xf32, #tpu.memory_space<vmem>>, vector<8x128xf32>,
    return
  }
  func.func @transform_0(%arg0: i32) -> (i32, i32) {
    %c0_i32 = arith.constant 0 : i32
    %c0_i32_0 = arith.constant 0 : i32
    return %arg0, %c0_i32 : i32, i32
  }
  func.func @transform_1(%arg0: i32) -> (i32, i32) {
    %c0_i32 = arith.constant 0 : i32
    %c0_i32_0 = arith.constant 0 : i32
    %c0_i32_1 = arith.constant 0 : i32
    return %c0_i32, %c0_i32_0 : i32, i32
  }
  func.func @transform_2(%arg0: i32) -> (i32, i32) {
    %c0_i32 = arith.constant 0 : i32
    %c0_i32_0 = arith.constant 0 : i32
    %c0_i32_1 = arith.constant 0 : i32
    return %c0_i32, %c0_i32_0 : i32, i32
  }
  func.func @transform_3(%arg0: i32) -> (i32, i32) {
    %c0_i32 = arith.constant 0 : i32
    %c0_i32_0 = arith.constant 0 : i32
    %c0_i32_1 = arith.constant 0 : i32
    return %c0_i32, %c0_i32_0 : i32, i32
  }
  func.func @transform_4(%arg0: i32) -> (i32, i32) {
    %c0_i32 = arith.constant 0 : i32
    %c0_i32_0 = arith.constant 0 : i32
    %c0_i32_1 = arith.constant 0 : i32
    return %c0_i32, %c0_i32_0 : i32, i32
  }
  func.func @transform_5(%arg0: i32) -> (i32, i32) {
    %c0_i32 = arith.constant 0 : i32
    %c0_i32_0 = arith.constant 0 : i32
    return %arg0, %c0_i32 : i32, i32
  }
  func.func @transform_6(%arg0: i32) -> (i32, i32) {
    %c0_i32 = arith.constant 0 : i32
    %c0_i32_0 = arith.constant 0 : i32
    return %arg0, %c0_i32 : i32, i32
  }
}

module attributes {stable_mosaic.version = 11 : i64} {
  func.func @_ae_kernel(%arg0: i32, %arg1: memref<8x128xbf16, #tpu.memory_space<vmem>>, %arg2: memref<128x128xbf16, #tpu.memory_space<vmem>>, %arg3: memref<1x128xf32, #tpu.memory_space<vmem>>, %arg4: memref<128x128xbf16, #tpu.memory_space<vmem>>, %arg5: memref<1x128xf32, #tpu.memory_space<vmem>>, %arg6: memref<8x128xf32, #tpu.memory_space<vmem>>, %arg7: memref<8x128xf32, #tpu.memory_space<vmem>>) attributes {dimension_semantics = [#tpu.dimension_semantics<parallel>], iteration_bounds = array<i64: 1>, scalar_prefetch = 0 : i64, scratch_operands = 0 : i64, tpu.core_type = #tpu.core_type<tc>, window_params = [{transform_indices = @transform_0, window_bounds = array<i64: 8, 128>}, {pipeline_mode = #tpu.pipeline_mode<synchronous>, transform_indices = @transform_1, window_bounds = array<i64: 128, 128>}, {pipeline_mode = #tpu.pipeline_mode<synchronous>, transform_indices = @transform_2, window_bounds = array<i64: 1, 128>}, {pipeline_mode = #tpu.pipeline_mode<synchronous>, transform_indices = @transform_3, window_bounds = array<i64: 128, 128>}, {pipeline_mode = #tpu.pipeline_mode<synchronous>, transform_indices = @transform_4, window_bounds = array<i64: 1, 128>}, {transform_indices = @transform_5, window_bounds = array<i64: 8, 128>}, {transform_indices = @transform_6, window_bounds = array<i64: 8, 128>}]} {
    %c0 = arith.constant 0 : index
    %c0_0 = arith.constant 0 : index
    %0 = vector.load %arg1[%c0, %c0_0] : memref<8x128xbf16, #tpu.memory_space<vmem>>, vector<8x128xbf16>
    %c0_1 = arith.constant 0 : index
    %c0_2 = arith.constant 0 : index
    %1 = vector.load %arg2[%c0_1, %c0_2] : memref<128x128xbf16, #tpu.memory_space<vmem>>, vector<128x128xbf16>
    %cst = arith.constant dense<0.000000e+00> : vector<8x128xf32>
    %2 = tpu.matmul %0, %1, %cst {dimension_numbers = #tpu.dot_dimension_numbers<[1], [0], [0], [1], [0, 0, 1, 1], [], []>} : vector<8x128xbf16>, vector<128x128xbf16>, vector<8x128xf32> -> vector<8x128xf32>
    %c0_3 = arith.constant 0 : index
    %c0_4 = arith.constant 0 : index
    %3 = vector.load %arg3[%c0_3, %c0_4] : memref<1x128xf32, #tpu.memory_space<vmem>>, vector<1x128xf32>
    %4 = vector.broadcast %3 : vector<1x128xf32> to vector<8x128xf32>
    %5 = arith.addf %2, %4 : vector<8x128xf32>
    %cst_5 = arith.constant 0.000000e+00 : f32
    %6 = vector.broadcast %cst_5 : f32 to vector<8x128xf32>
    %7 = arith.maximumf %5, %6 : vector<8x128xf32>
    %c0_6 = arith.constant 0 : index
    %c0_7 = arith.constant 0 : index
    %8 = vector.load %arg6[%c0_6, %c0_7] : memref<8x128xf32, #tpu.memory_space<vmem>>, vector<8x128xf32>
    tpu.vector_store %arg6[%c0_6, %c0_7], %7 {strides = array<i32>} : memref<8x128xf32, #tpu.memory_space<vmem>>, vector<8x128xf32>,
    %9 = arith.truncf %7 : vector<8x128xf32> to vector<8x128xbf16>
    %c0_8 = arith.constant 0 : index
    %c0_9 = arith.constant 0 : index
    %10 = vector.load %arg4[%c0_8, %c0_9] : memref<128x128xbf16, #tpu.memory_space<vmem>>, vector<128x128xbf16>
    %cst_10 = arith.constant dense<0.000000e+00> : vector<8x128xf32>
    %11 = tpu.matmul %9, %10, %cst_10 {dimension_numbers = #tpu.dot_dimension_numbers<[1], [0], [0], [1], [0, 0, 1, 1], [], []>} : vector<8x128xbf16>, vector<128x128xbf16>, vector<8x128xf32> -> vector<8x128xf32>
    %c0_11 = arith.constant 0 : index
    %c0_12 = arith.constant 0 : index
    %12 = vector.load %arg5[%c0_11, %c0_12] : memref<1x128xf32, #tpu.memory_space<vmem>>, vector<1x128xf32>
    %13 = vector.broadcast %12 : vector<1x128xf32> to vector<8x128xf32>
    %14 = arith.addf %11, %13 : vector<8x128xf32>
    %cst_13 = arith.constant 0.000000e+00 : f32
    %15 = vector.broadcast %cst_13 : f32 to vector<8x128xf32>
    %16 = arith.maximumf %14, %15 : vector<8x128xf32>
    %c0_14 = arith.constant 0 : index
    %c0_15 = arith.constant 0 : index
    %17 = vector.load %arg7[%c0_14, %c0_15] : memref<8x128xf32, #tpu.memory_space<vmem>>, vector<8x128xf32>
    tpu.vector_store %arg7[%c0_14, %c0_15], %16 {strides = array<i32>} : memref<8x128xf32, #tpu.memory_space<vmem>>, vector<8x128xf32>,
    return
  }
  func.func @transform_0(%arg0: i32) -> (i32, i32) {
    %c0_i32 = arith.constant 0 : i32
    %c0_i32_0 = arith.constant 0 : i32
    return %arg0, %c0_i32 : i32, i32
  }
  func.func @transform_1(%arg0: i32) -> (i32, i32) {
    %c0_i32 = arith.constant 0 : i32
    %c0_i32_0 = arith.constant 0 : i32
    %c0_i32_1 = arith.constant 0 : i32
    return %c0_i32, %c0_i32_0 : i32, i32
  }
  func.func @transform_2(%arg0: i32) -> (i32, i32) {
    %c0_i32 = arith.constant 0 : i32
    %c0_i32_0 = arith.constant 0 : i32
    %c0_i32_1 = arith.constant 0 : i32
    return %c0_i32, %c0_i32_0 : i32, i32
  }
  func.func @transform_3(%arg0: i32) -> (i32, i32) {
    %c0_i32 = arith.constant 0 : i32
    %c0_i32_0 = arith.constant 0 : i32
    %c0_i32_1 = arith.constant 0 : i32
    return %c0_i32, %c0_i32_0 : i32, i32
  }
  func.func @transform_4(%arg0: i32) -> (i32, i32) {
    %c0_i32 = arith.constant 0 : i32
    %c0_i32_0 = arith.constant 0 : i32
    %c0_i32_1 = arith.constant 0 : i32
    return %c0_i32, %c0_i32_0 : i32, i32
  }
  func.func @transform_5(%arg0: i32) -> (i32, i32) {
    %c0_i32 = arith.constant 0 : i32
    %c0_i32_0 = arith.constant 0 : i32
    return %arg0, %c0_i32 : i32, i32
  }
  func.func @transform_6(%arg0: i32) -> (i32, i32) {
    %c0_i32 = arith.constant 0 : i32
    %c0_i32_0 = arith.constant 0 : i32
    return %arg0, %c0_i32 : i32, i32
  }
}

</mosaic_0001>

<llo_original>
// kernel: _ae_forward_impl.1
$region0: #{_ae_forward_impl.1}
  #allocation0 [shape = 'u32[]', space=smem, size = 0x4, offset = 0x4, fixed_abs, tag = 'smem constant byte address 0x4 - core index']
  #allocation1 [shape = 'u32[144,128]{1,0:T(1,128)}', space=vmem, size = 0x12000, scoped, tag = 'internal scratch']
  %s0 = inlined_call_operand.vmem [shape: bf16[8,128], index: 0, kind: input, shape index: {}]
  %s1 = inlined_call_operand.hbm [shape: bf16[128,128], index: 1, kind: input, shape index: {}]
  %s2 = inlined_call_operand.vmem [shape: f32[1,128], index: 2, kind: input, shape index: {}]
  %s3 = inlined_call_operand.hbm [shape: bf16[128,128], index: 3, kind: input, shape index: {}]
  %s4 = inlined_call_operand.vmem [shape: f32[1,128], index: 4, kind: input, shape index: {}]
  %s5 = inlined_call_operand.hbm [shape: f32[8,128], index: 5, kind: output, shape index: {0}]
  %s6 = inlined_call_operand.hbm [shape: f32[8,128], index: 6, kind: output, shape index: {1}]
  %7 = xla_tuple %s5, %s6
  %s8 = sld [smem:[#allocation0]]
  $region46: #{_ae_forward_impl.1} parent=0
    _
  %s10 = ssub.s32 1, %s8
  %s11 = scalar_select 0, %s10, %s8
  $region1: #{_ae_forward_impl.1} parent=0
    #allocation2 [shape = 'u8[32768]{0}', space=vmem, size = 0x8000, scoped, tag = 'input window, operand 1, single buffered']
    #allocation3 [shape = 's32[1]{0}', space=sflag, size = 0x4, scoped, tag = 'scoped memory for _ae_forward_impl.1']
    #allocation4 [shape = 's32[1]{0}', space=sflag, size = 0x4, scoped, tag = 'scoped memory for _ae_forward_impl.1']
    #allocation5 [shape = 'u8[32768]{0}', space=vmem, size = 0x8000, scoped, tag = 'input window, operand 3, single buffered']
    #allocation6 [shape = 's32[1]{0}', space=sflag, size = 0x4, scoped, tag = 'scoped memory for _ae_forward_impl.1']
    #allocation7 [shape = 'u8[4096]{0}', space=vmem, size = 0x1000, scoped, tag = 'output window, operand 0, single buffered']
    #allocation8 [shape = 'u8[4096]{0}', space=vmem, size = 0x1000, scoped, tag = 'output window, operand 1, single buffered']
    #allocation9 [shape = 's32[1]{0}', space=sflag, size = 0x4, scoped, tag = 'scoped memory for _ae_forward_impl.1']
    %12 = vsyncpa [#allocation3], 0
    %13 = vsyncpa [#allocation6], 0
    %14 = vsyncpa [#allocation4], 0
    %15 = vsyncpa [#allocation9], 0
    // Predicated region
    $region2: #{_ae_forward_impl.1} parent=1 // pred_check
      _
    $region3: #{_ae_forward_impl.1} parent=1 // pred_check_branch
      %17 = sbr.rel (0) target = $region5
    $region4: #{_ae_forward_impl.1} parent=1 // pred_region
      _
    $region5: #{_ae_forward_impl.1} parent=1 // pred_fallthru
      _
    // Predicated region
    $region6: #{_ae_forward_impl.1} parent=1 // pred_check
      _
    $region7: #{_ae_forward_impl.1} parent=1 // pred_check_branch
      %19 = sbr.rel (0) target = $region9
    $region8: #{_ae_forward_impl.1} parent=1 // pred_region
      %s21 = ssub.s32 1024, 1024
      %22 = vsyncadd [#allocation3], %s21
      %s23 = sshll.u32 [#allocation2], 4
      %s24 = int_to_ptr.vmem [resolvable:$true] %s23
      %29 = dma.hbm_to_vmem [thread:$0]  %s1, 1024, %s24, [#allocation3], 64, 64, 4
    $region9: #{_ae_forward_impl.1} parent=1 // pred_fallthru
      _
    // Predicated region
    $region10: #{_ae_forward_impl.1} parent=1 // pred_check
      _
    $region11: #{_ae_forward_impl.1} parent=1 // pred_check_branch
      %31 = sbr.rel (0) target = $region13
    $region12: #{_ae_forward_impl.1} parent=1 // pred_region
      _
    $region13: #{_ae_forward_impl.1} parent=1 // pred_fallthru
      _
    // Predicated region
    $region14: #{_ae_forward_impl.1} parent=1 // pred_check
      _
    $region15: #{_ae_forward_impl.1} parent=1 // pred_check_branch
      %33 = sbr.rel (0) target = $region17
    $region16: #{_ae_forward_impl.1} parent=1 // pred_region
      %s35 = ssub.s32 1024, 1024
      %36 = vsyncadd [#allocation6], %s35
      %s37 = sshll.u32 [#allocation5], 4
      %s38 = int_to_ptr.vmem [resolvable:$true] %s37
      %43 = dma.hbm_to_vmem [thread:$0]  %s3, 1024, %s38, [#allocation6], 64, 64, 4
    $region17: #{_ae_forward_impl.1} parent=1 // pred_fallthru
      _
    // Predicated region
    $region18: #{_ae_forward_impl.1} parent=1 // pred_check
      _
    $region19: #{_ae_forward_impl.1} parent=1 // pred_check_branch
      %45 = sbr.rel (0) target = $region21
    $region20: #{_ae_forward_impl.1} parent=1 // pred_region
      _
    $region21: #{_ae_forward_impl.1} parent=1 // pred_fallthru
      _
    // Predicated region
    $region22: #{_ae_forward_impl.1} parent=1 // pred_check
      _
    $region23: #{_ae_forward_impl.1} parent=1 // pred_check_branch
      %47 = sbr.rel (0) target = $region25
    $region24: #{_ae_forward_impl.1} parent=1 // pred_region
      %48 = dma.done [#allocation3], 1024
    $region25: #{_ae_forward_impl.1} parent=1 // pred_fallthru
      _
    // Predicated region
    $region26: #{_ae_forward_impl.1} parent=1 // pred_check
      _
    $region27: #{_ae_forward_impl.1} parent=1 // pred_check_branch
      %50 = sbr.rel (0) target = $region29
    $region28: #{_ae_forward_impl.1} parent=1 // pred_region
      %51 = dma.done [#allocation6], 1024
    $region29: #{_ae_forward_impl.1} parent=1 // pred_fallthru
      _
    %v53 = vld [vmem:[%s0] sm:$0xf]
    %v54 = vld [vmem:[#allocation2] sm:$0xf]
    %v55 = vld [vmem:[#allocation2 + $0x4] sm:$0xf]
    %v56 = vld [vmem:[#allocation2 + $0x8] sm:$0xf]
    %v57 = vld [vmem:[#allocation2 + $0xc] sm:$0xf]
    %v58 = vld [vmem:[#allocation2 + $0x10] sm:$0xf]
    %v59 = vld [vmem:[#allocation2 + $0x14] sm:$0xf]
    %v60 = vld [vmem:[#allocation2 + $0x18] sm:$0xf]
    %v61 = vld [vmem:[#allocation2 + $0x1c] sm:$0xf]
    %v62 = vld [vmem:[#allocation2 + $0x20] sm:$0xf]
    %v63 = vld [vmem:[#allocation2 + $0x24] sm:$0xf]
    %v64 = vld [vmem:[#allocation2 + $0x28] sm:$0xf]
    %v65 = vld [vmem:[#allocation2 + $0x2c] sm:$0xf]
    %v66 = vld [vmem:[#allocation2 + $0x30] sm:$0xf]
    %v67 = vld [vmem:[#allocation2 + $0x34] sm:$0xf]
    %v68 = vld [vmem:[#allocation2 + $0x38] sm:$0xf]
    %v69 = vld [vmem:[#allocation2 + $0x3c] sm:$0xf]
    %v70 = vld [vmem:[%s2] sm:$0x1]
    %v72 = vlaneseq
    %v73 = vshrl.u32 %v72, 7
    %v74 = vsub.s32 0, %v73
    %v75 = vrot.slane %v70, %v74
    %v93 = vunpack.c.l.b16 %v54
    %v94 = vunpack.c.l.b16 %v55
    %v95 = vunpack.c.l.b16 %v56
    %v96 = vunpack.c.l.b16 %v57
    %v97 = vunpack.c.l.b16 %v58
    %v98 = vunpack.c.l.b16 %v59
    %v99 = vunpack.c.l.b16 %v60
    %v100 = vunpack.c.l.b16 %v61
    %v101 = vunpack.c.l.b16 %v62
    %v102 = vunpack.c.l.b16 %v63
    %v103 = vunpack.c.l.b16 %v64
    %v104 = vunpack.c.l.b16 %v65
    %v105 = vunpack.c.l.b16 %v66
    %v106 = vunpack.c.l.b16 %v67
    %v107 = vunpack.c.l.b16 %v68
    %v108 = vunpack.c.l.b16 %v69
    %v109 = vpack.c.b16 %v94, %v93
    %v110 = vpack.c.b16 %v96, %v95
    %v111 = vpack.c.b16 %v98, %v97
    %v112 = vpack.c.b16 %v100, %v99
    %v113 = vpack.c.b16 %v102, %v101
    %v114 = vpack.c.b16 %v104, %v103
    %v115 = vpack.c.b16 %v106, %v105
    %v116 = vpack.c.b16 %v108, %v107
    %125 = vmatprep.subr.bf16.mxu0 0
    %126 = vmatpush1.bf16.msra.mxu0 %v116
    %127 = vmatprep.subr.bf16.mxu0 0
    %128 = vmatpush1.bf16.msra.mxu0 %v115
    %129 = vmatprep.subr.bf16.mxu0 0
    %130 = vmatpush1.bf16.msra.mxu0 %v114
    %131 = vmatprep.subr.bf16.mxu0 0
    %132 = vmatpush1.bf16.msra.mxu0 %v113
    %133 = vmatprep.subr.bf16.mxu0 0
    %134 = vmatpush1.bf16.msra.mxu0 %v112
    %135 = vmatprep.subr.bf16.mxu0 0
    %136 = vmatpush1.bf16.msra.mxu0 %v111
    %137 = vmatprep.subr.bf16.mxu0 0
    %138 = vmatpush1.bf16.msra.mxu0 %v110
    %139 = vmatprep.subr.bf16.mxu0 0
    %140 = vmatpush1.bf16.msra.mxu0 %v109
    %141 = vmatprep.subr.bf16.mxu0 0
    %142 = vmatpush2.bf16.msra.mxu0 0
    %143 = vmatprep.subr.bf16.mxu0 0
    %144 = vmatpush2.bf16.msra.mxu0 0
    %145 = vmatprep.subr.bf16.mxu0 0
    %146 = vmatpush2.bf16.msra.mxu0 0
    %147 = vmatprep.subr.bf16.mxu0 0
    %148 = vmatpush2.bf16.msra.mxu0 0
    %149 = vmatprep.subr.bf16.mxu0 0
    %150 = vmatpush2.bf16.msra.mxu0 0
    %151 = vmatprep.subr.bf16.mxu0 0
    %152 = vmatpush2.bf16.msra.mxu0 0
    %153 = vmatprep.subr.bf16.mxu0 0
    %154 = vmatpush2.bf16.msra.mxu0 0
    %155 = vmatprep.subr.bf16.mxu0 0
    %156 = vmatpush2.bf16.msra.mxu0 0
    %157 = vmatprep.mubr.bf16.mxu0 0
    %158 = vmatmul.mubr.bf16.gmra.mxu0 %v53
    %v159 = vpop.f32.mrf.mxu0
    %v160 = vadd.f32 %v75, %v159
    %v161 = vpop.f32.mrf.mxu0
    %v162 = vpop.f32.mrf.mxu0
    %v163 = vpop.f32.mrf.mxu0
    %164 = vdwg.mxu0
    %v165 = vmax.f32 %v160, 0.0
    %166 = vst [vmem:[#allocation7] sm:$0xff] %v165
    %v167 = vpack.c.bf16 %v165, %v165
    %v168 = vld [vmem:[#allocation5] sm:$0xf]
    %v169 = vld [vmem:[#allocation5 + $0x4] sm:$0xf]
    %v170 = vld [vmem:[#allocation5 + $0x8] sm:$0xf]
    %v171 = vld [vmem:[#allocation5 + $0xc] sm:$0xf]
    %v172 = vld [vmem:[#allocation5 + $0x10] sm:$0xf]
    %v173 = vld [vmem:[#allocation5 + $0x14] sm:$0xf]
    %v174 = vld [vmem:[#allocation5 + $0x18] sm:$0xf]
    %v175 = vld [vmem:[#allocation5 + $0x1c] sm:$0xf]
    %v176 = vld [vmem:[#allocation5 + $0x20] sm:$0xf]
    %v177 = vld [vmem:[#allocation5 + $0x24] sm:$0xf]
    %v178 = vld [vmem:[#allocation5 + $0x28] sm:$0xf]
    %v179 = vld [vmem:[#allocation5 + $0x2c] sm:$0xf]
    %v180 = vld [vmem:[#allocation5 + $0x30] sm:$0xf]
    %v181 = vld [vmem:[#allocation5 + $0x34] sm:$0xf]
    %v182 = vld [vmem:[#allocation5 + $0x38] sm:$0xf]
    %v183 = vld [vmem:[#allocation5 + $0x3c] sm:$0xf]
    %v184 = vld [vmem:[%s4] sm:$0x1]
    %v186 = vlaneseq
    %v187 = vshrl.u32 %v186, 7
    %v188 = vsub.s32 0, %v187
    %v189 = vrot.slane %v184, %v188
    %v207 = vunpack.c.l.b16 %v168
    %v208 = vunpack.c.l.b16 %v169
    %v209 = vunpack.c.l.b16 %v170
    %v210 = vunpack.c.l.b16 %v171
    %v211 = vunpack.c.l.b16 %v172
    %v212 = vunpack.c.l.b16 %v173
    %v213 = vunpack.c.l.b16 %v174
    %v214 = vunpack.c.l.b16 %v175
    %v215 = vunpack.c.l.b16 %v176
    %v216 = vunpack.c.l.b16 %v177
    %v217 = vunpack.c.l.b16 %v178
    %v218 = vunpack.c.l.b16 %v179
    %v219 = vunpack.c.l.b16 %v180
    %v220 = vunpack.c.l.b16 %v181
    %v221 = vunpack.c.l.b16 %v182
    %v222 = vunpack.c.l.b16 %v183
    %v223 = vpack.c.b16 %v208, %v207
    %v224 = vpack.c.b16 %v210, %v209
    %v225 = vpack.c.b16 %v212, %v211
    %v226 = vpack.c.b16 %v214, %v213
    %v227 = vpack.c.b16 %v216, %v215
    %v228 = vpack.c.b16 %v218, %v217
    %v229 = vpack.c.b16 %v220, %v219
    %v230 = vpack.c.b16 %v222, %v221
    %239 = vmatprep.subr.bf16.mxu0 0
    %240 = vmatpush1.bf16.msra.mxu0 %v230
    %241 = vmatprep.subr.bf16.mxu0 0
    %242 = vmatpush1.bf16.msra.mxu0 %v229
    %243 = vmatprep.subr.bf16.mxu0 0
    %244 = vmatpush1.bf16.msra.mxu0 %v228
    %245 = vmatprep.subr.bf16.mxu0 0
    %246 = vmatpush1.bf16.msra.mxu0 %v227
    %247 = vmatprep.subr.bf16.mxu0 0
    %248 = vmatpush1.bf16.msra.mxu0 %v226
    %249 = vmatprep.subr.bf16.mxu0 0
    %250 = vmatpush1.bf16.msra.mxu0 %v225
    %251 = vmatprep.subr.bf16.mxu0 0
    %252 = vmatpush1.bf16.msra.mxu0 %v224
    %253 = vmatprep.subr.bf16.mxu0 0
    %254 = vmatpush1.bf16.msra.mxu0 %v223
    %255 = vmatprep.subr.bf16.mxu0 0
    %256 = vmatpush2.bf16.msra.mxu0 0
    %257 = vmatprep.subr.bf16.mxu0 0
    %258 = vmatpush2.bf16.msra.mxu0 0
    %259 = vmatprep.subr.bf16.mxu0 0
    %260 = vmatpush2.bf16.msra.mxu0 0
    %261 = vmatprep.subr.bf16.mxu0 0
    %262 = vmatpush2.bf16.msra.mxu0 0
    %263 = vmatprep.subr.bf16.mxu0 0
    %264 = vmatpush2.bf16.msra.mxu0 0
    %265 = vmatprep.subr.bf16.mxu0 0
    %266 = vmatpush2.bf16.msra.mxu0 0
    %267 = vmatprep.subr.bf16.mxu0 0
    %268 = vmatpush2.bf16.msra.mxu0 0
    %269 = vmatprep.subr.bf16.mxu0 0
    %270 = vmatpush2.bf16.msra.mxu0 0
    %271 = vmatprep.mubr.bf16.mxu0 0
    %272 = vmatmul.mubr.bf16.gmra.mxu0 %v167
    %v273 = vpop.f32.mrf.mxu0
    %v274 = vadd.f32 %v189, %v273
    %v275 = vpop.f32.mrf.mxu0
    %v276 = vpop.f32.mrf.mxu0
    %v277 = vpop.f32.mrf.mxu0
    %278 = vdwg.mxu0
    %v279 = vmax.f32 %v274, 0.0
    %280 = vst [vmem:[#allocation8] sm:$0xff] %v279
    // Predicated region
    $region30: #{_ae_forward_impl.1} parent=1 // pred_check
      _
    $region31: #{_ae_forward_impl.1} parent=1 // pred_check_branch
      %282 = sbr.rel (0) target = $region33
    $region32: #{_ae_forward_impl.1} parent=1 // pred_region
      %s284 = ssub.s32 128, 128
      %285 = vsyncadd [#allocation4], %s284
      %s287 = sshll.u32 [#allocation7], 4
      %s288 = int_to_ptr.vmem [resolvable:$true] %s287
      %290 = dma.vmem_to_hbm [thread:$0]  %s288, 128, %s5, [#allocation4]
    $region33: #{_ae_forward_impl.1} parent=1 // pred_fallthru
      _
    // Predicated region
    $region34: #{_ae_forward_impl.1} parent=1 // pred_check
      _
    $region35: #{_ae_forward_impl.1} parent=1 // pred_check_branch
      %292 = sbr.rel (0) target = $region37
    $region36: #{_ae_forward_impl.1} parent=1 // pred_region
      %s294 = ssub.s32 128, 128
      %295 = vsyncadd [#allocation9], %s294
      %s297 = sshll.u32 [#allocation8], 4
      %s298 = int_to_ptr.vmem [resolvable:$true] %s297
      %300 = dma.vmem_to_hbm [thread:$0]  %s298, 128, %s6, [#allocation9]
    $region37: #{_ae_forward_impl.1} parent=1 // pred_fallthru
      _
    // Predicated region
    $region38: #{_ae_forward_impl.1} parent=1 // pred_check
      _
    $region39: #{_ae_forward_impl.1} parent=1 // pred_check_branch
      %302 = sbr.rel (0) target = $region41
    $region40: #{_ae_forward_impl.1} parent=1 // pred_region
      %303 = dma.done [#allocation4], 128
    $region41: #{_ae_forward_impl.1} parent=1 // pred_fallthru
      _
    // Predicated region
    $region42: #{_ae_forward_impl.1} parent=1 // pred_check
      _
    $region43: #{_ae_forward_impl.1} parent=1 // pred_check_branch
      %305 = sbr.rel (0) target = $region45
    $region44: #{_ae_forward_impl.1} parent=1 // pred_region
      %306 = dma.done [#allocation9], 128
    $region45: #{_ae_forward_impl.1} parent=1 // pred_fallthru
      _
    %307 = vsyncpa [#allocation3], 1
    %308 = vsyncpa [#allocation6], 1
    %309 = vsyncpa [#allocation4], 1
    %310 = vsyncpa [#allocation9], 1

// kernel: _ae_forward_impl.1
$region0: #{_ae_forward_impl.1}
  #allocation0 [shape = 'u32[]', space=smem, size = 0x4, offset = 0x4, fixed_abs, tag = 'smem constant byte address 0x4 - core index']
  #allocation1 [shape = 'u32[144,128]{1,0:T(1,128)}', space=vmem, size = 0x12000, scoped, tag = 'internal scratch']
  %s0 = inlined_call_operand.vmem [shape: bf16[8,128], index: 0, kind: input, shape index: {}]
  %s1 = inlined_call_operand.hbm [shape: bf16[128,128], index: 1, kind: input, shape index: {}]
  %s2 = inlined_call_operand.vmem [shape: f32[1,128], index: 2, kind: input, shape index: {}]
  %s3 = inlined_call_operand.hbm [shape: bf16[128,128], index: 3, kind: input, shape index: {}]
  %s4 = inlined_call_operand.vmem [shape: f32[1,128], index: 4, kind: input, shape index: {}]
  %s5 = inlined_call_operand.hbm [shape: f32[8,128], index: 5, kind: output, shape index: {0}]
  %s6 = inlined_call_operand.hbm [shape: f32[8,128], index: 6, kind: output, shape index: {1}]
  %7 = xla_tuple %s5, %s6
  %s8 = sld [smem:[#allocation0]]
  $region46: #{_ae_forward_impl.1} parent=0
    _
  %s10 = ssub.s32 1, %s8
  %s11 = scalar_select 0, %s10, %s8
  $region1: #{_ae_forward_impl.1} parent=0
    #allocation2 [shape = 'u8[32768]{0}', space=vmem, size = 0x8000, scoped, tag = 'input window, operand 1, single buffered']
    #allocation3 [shape = 's32[1]{0}', space=sflag, size = 0x4, scoped, tag = 'scoped memory for _ae_forward_impl.1']
    #allocation4 [shape = 's32[1]{0}', space=sflag, size = 0x4, scoped, tag = 'scoped memory for _ae_forward_impl.1']
    #allocation5 [shape = 'u8[32768]{0}', space=vmem, size = 0x8000, scoped, tag = 'input window, operand 3, single buffered']
    #allocation6 [shape = 's32[1]{0}', space=sflag, size = 0x4, scoped, tag = 'scoped memory for _ae_forward_impl.1']
    #allocation7 [shape = 'u8[4096]{0}', space=vmem, size = 0x1000, scoped, tag = 'output window, operand 0, single buffered']
    #allocation8 [shape = 'u8[4096]{0}', space=vmem, size = 0x1000, scoped, tag = 'output window, operand 1, single buffered']
    #allocation9 [shape = 's32[1]{0}', space=sflag, size = 0x4, scoped, tag = 'scoped memory for _ae_forward_impl.1']
    %12 = vsyncpa [#allocation3], 0
    %13 = vsyncpa [#allocation6], 0
    %14 = vsyncpa [#allocation4], 0
    %15 = vsyncpa [#allocation9], 0
    // Predicated region
    $region2: #{_ae_forward_impl.1} parent=1 // pred_check
      _
    $region3: #{_ae_forward_impl.1} parent=1 // pred_check_branch
      %17 = sbr.rel (0) target = $region5
    $region4: #{_ae_forward_impl.1} parent=1 // pred_region
      _
    $region5: #{_ae_forward_impl.1} parent=1 // pred_fallthru
      _
    // Predicated region
    $region6: #{_ae_forward_impl.1} parent=1 // pred_check
      _
    $region7: #{_ae_forward_impl.1} parent=1 // pred_check_branch
      %19 = sbr.rel (0) target = $region9
    $region8: #{_ae_forward_impl.1} parent=1 // pred_region
      %s21 = ssub.s32 1024, 1024
      %22 = vsyncadd [#allocation3], %s21
      %s23 = sshll.u32 [#allocation2], 4
      %s24 = int_to_ptr.vmem [resolvable:$true] %s23
      %29 = dma.hbm_to_vmem [thread:$0]  %s1, 1024, %s24, [#allocation3], 64, 64, 4
    $region9: #{_ae_forward_impl.1} parent=1 // pred_fallthru
      _
    // Predicated region
    $region10: #{_ae_forward_impl.1} parent=1 // pred_check
      _
    $region11: #{_ae_forward_impl.1} parent=1 // pred_check_branch
      %31 = sbr.rel (0) target = $region13
    $region12: #{_ae_forward_impl.1} parent=1 // pred_region
      _
    $region13: #{_ae_forward_impl.1} parent=1 // pred_fallthru
      _
    // Predicated region
    $region14: #{_ae_forward_impl.1} parent=1 // pred_check
      _
    $region15: #{_ae_forward_impl.1} parent=1 // pred_check_branch
      %33 = sbr.rel (0) target = $region17
    $region16: #{_ae_forward_impl.1} parent=1 // pred_region
      %s35 = ssub.s32 1024, 1024
      %36 = vsyncadd [#allocation6], %s35
      %s37 = sshll.u32 [#allocation5], 4
      %s38 = int_to_ptr.vmem [resolvable:$true] %s37
      %43 = dma.hbm_to_vmem [thread:$0]  %s3, 1024, %s38, [#allocation6], 64, 64, 4
    $region17: #{_ae_forward_impl.1} parent=1 // pred_fallthru
      _
    // Predicated region
    $region18: #{_ae_forward_impl.1} parent=1 // pred_check
      _
    $region19: #{_ae_forward_impl.1} parent=1 // pred_check_branch
      %45 = sbr.rel (0) target = $region21
    $region20: #{_ae_forward_impl.1} parent=1 // pred_region
      _
    $region21: #{_ae_forward_impl.1} parent=1 // pred_fallthru
      _
    // Predicated region
    $region22: #{_ae_forward_impl.1} parent=1 // pred_check
      _
    $region23: #{_ae_forward_impl.1} parent=1 // pred_check_branch
      %47 = sbr.rel (0) target = $region25
    $region24: #{_ae_forward_impl.1} parent=1 // pred_region
      %48 = dma.done [#allocation3], 1024
    $region25: #{_ae_forward_impl.1} parent=1 // pred_fallthru
      _
    // Predicated region
    $region26: #{_ae_forward_impl.1} parent=1 // pred_check
      _
    $region27: #{_ae_forward_impl.1} parent=1 // pred_check_branch
      %50 = sbr.rel (0) target = $region29
    $region28: #{_ae_forward_impl.1} parent=1 // pred_region
      %51 = dma.done [#allocation6], 1024
    $region29: #{_ae_forward_impl.1} parent=1 // pred_fallthru
      _
    %v53 = vld [vmem:[%s0] sm:$0xf]
    %v54 = vld [vmem:[#allocation2] sm:$0xf]
    %v55 = vld [vmem:[#allocation2 + $0x4] sm:$0xf]
    %v56 = vld [vmem:[#allocation2 + $0x8] sm:$0xf]
    %v57 = vld [vmem:[#allocation2 + $0xc] sm:$0xf]
    %v58 = vld [vmem:[#allocation2 + $0x10] sm:$0xf]
    %v59 = vld [vmem:[#allocation2 + $0x14] sm:$0xf]
    %v60 = vld [vmem:[#allocation2 + $0x18] sm:$0xf]
    %v61 = vld [vmem:[#allocation2 + $0x1c] sm:$0xf]
    %v62 = vld [vmem:[#allocation2 + $0x20] sm:$0xf]
    %v63 = vld [vmem:[#allocation2 + $0x24] sm:$0xf]
    %v64 = vld [vmem:[#allocation2 + $0x28] sm:$0xf]
    %v65 = vld [vmem:[#allocation2 + $0x2c] sm:$0xf]
    %v66 = vld [vmem:[#allocation2 + $0x30] sm:$0xf]
    %v67 = vld [vmem:[#allocation2 + $0x34] sm:$0xf]
    %v68 = vld [vmem:[#allocation2 + $0x38] sm:$0xf]
    %v69 = vld [vmem:[#allocation2 + $0x3c] sm:$0xf]
    %v70 = vld [vmem:[%s2] sm:$0x1]
    %v72 = vlaneseq
    %v73 = vshrl.u32 %v72, 7
    %v74 = vsub.s32 0, %v73
    %v75 = vrot.slane %v70, %v74
    %v93 = vunpack.c.l.b16 %v54
    %v94 = vunpack.c.l.b16 %v55
    %v95 = vunpack.c.l.b16 %v56
    %v96 = vunpack.c.l.b16 %v57
    %v97 = vunpack.c.l.b16 %v58
    %v98 = vunpack.c.l.b16 %v59
    %v99 = vunpack.c.l.b16 %v60
    %v100 = vunpack.c.l.b16 %v61
    %v101 = vunpack.c.l.b16 %v62
    %v102 = vunpack.c.l.b16 %v63
    %v103 = vunpack.c.l.b16 %v64
    %v104 = vunpack.c.l.b16 %v65
    %v105 = vunpack.c.l.b16 %v66
    %v106 = vunpack.c.l.b16 %v67
    %v107 = vunpack.c.l.b16 %v68
    %v108 = vunpack.c.l.b16 %v69
    %v109 = vpack.c.b16 %v94, %v93
    %v110 = vpack.c.b16 %v96, %v95
    %v111 = vpack.c.b16 %v98, %v97
    %v112 = vpack.c.b16 %v100, %v99
    %v113 = vpack.c.b16 %v102, %v101
    %v114 = vpack.c.b16 %v104, %v103
    %v115 = vpack.c.b16 %v106, %v105
    %v116 = vpack.c.b16 %v108, %v107
    %125 = vmatprep.subr.bf16.mxu0 0
    %126 = vmatpush1.bf16.msra.mxu0 %v116
    %127 = vmatprep.subr.bf16.mxu0 0
    %128 = vmatpush1.bf16.msra.mxu0 %v115
    %129 = vmatprep.subr.bf16.mxu0 0
    %130 = vmatpush1.bf16.msra.mxu0 %v114
    %131 = vmatprep.subr.bf16.mxu0 0
    %132 = vmatpush1.bf16.msra.mxu0 %v113
    %133 = vmatprep.subr.bf16.mxu0 0
    %134 = vmatpush1.bf16.msra.mxu0 %v112
    %135 = vmatprep.subr.bf16.mxu0 0
    %136 = vmatpush1.bf16.msra.mxu0 %v111
    %137 = vmatprep.subr.bf16.mxu0 0
    %138 = vmatpush1.bf16.msra.mxu0 %v110
    %139 = vmatprep.subr.bf16.mxu0 0
    %140 = vmatpush1.bf16.msra.mxu0 %v109
    %141 = vmatprep.subr.bf16.mxu0 0
    %142 = vmatpush2.bf16.msra.mxu0 0
    %143 = vmatprep.subr.bf16.mxu0 0
    %144 = vmatpush2.bf16.msra.mxu0 0
    %145 = vmatprep.subr.bf16.mxu0 0
    %146 = vmatpush2.bf16.msra.mxu0 0
    %147 = vmatprep.subr.bf16.mxu0 0
    %148 = vmatpush2.bf16.msra.mxu0 0
    %149 = vmatprep.subr.bf16.mxu0 0
    %150 = vmatpush2.bf16.msra.mxu0 0
    %151 = vmatprep.subr.bf16.mxu0 0
    %152 = vmatpush2.bf16.msra.mxu0 0
    %153 = vmatprep.subr.bf16.mxu0 0
    %154 = vmatpush2.bf16.msra.mxu0 0
    %155 = vmatprep.subr.bf16.mxu0 0
    %156 = vmatpush2.bf16.msra.mxu0 0
    %157 = vmatprep.mubr.bf16.mxu0 0
    %158 = vmatmul.mubr.bf16.gmra.mxu0 %v53
    %v159 = vpop.f32.mrf.mxu0
    %v160 = vadd.f32 %v75, %v159
    %v161 = vpop.f32.mrf.mxu0
    %v162 = vpop.f32.mrf.mxu0
    %v163 = vpop.f32.mrf.mxu0
    %164 = vdwg.mxu0
    %v165 = vmax.f32 %v160, 0.0
    %166 = vst [vmem:[#allocation7] sm:$0xff] %v165
    %v167 = vpack.c.bf16 %v165, %v165
    %v168 = vld [vmem:[#allocation5] sm:$0xf]
    %v169 = vld [vmem:[#allocation5 + $0x4] sm:$0xf]
    %v170 = vld [vmem:[#allocation5 + $0x8] sm:$0xf]
    %v171 = vld [vmem:[#allocation5 + $0xc] sm:$0xf]
    %v172 = vld [vmem:[#allocation5 + $0x10] sm:$0xf]
    %v173 = vld [vmem:[#allocation5 + $0x14] sm:$0xf]
    %v174 = vld [vmem:[#allocation5 + $0x18] sm:$0xf]
    %v175 = vld [vmem:[#allocation5 + $0x1c] sm:$0xf]
    %v176 = vld [vmem:[#allocation5 + $0x20] sm:$0xf]
    %v177 = vld [vmem:[#allocation5 + $0x24] sm:$0xf]
    %v178 = vld [vmem:[#allocation5 + $0x28] sm:$0xf]
    %v179 = vld [vmem:[#allocation5 + $0x2c] sm:$0xf]
    %v180 = vld [vmem:[#allocation5 + $0x30] sm:$0xf]
    %v181 = vld [vmem:[#allocation5 + $0x34] sm:$0xf]
    %v182 = vld [vmem:[#allocation5 + $0x38] sm:$0xf]
    %v183 = vld [vmem:[#allocation5 + $0x3c] sm:$0xf]
    %v184 = vld [vmem:[%s4] sm:$0x1]
    %v186 = vlaneseq
    %v187 = vshrl.u32 %v186, 7
    %v188 = vsub.s32 0, %v187
    %v189 = vrot.slane %v184, %v188
    %v207 = vunpack.c.l.b16 %v168
    %v208 = vunpack.c.l.b16 %v169
    %v209 = vunpack.c.l.b16 %v170
    %v210 = vunpack.c.l.b16 %v171
    %v211 = vunpack.c.l.b16 %v172
    %v212 = vunpack.c.l.b16 %v173
    %v213 = vunpack.c.l.b16 %v174
    %v214 = vunpack.c.l.b16 %v175
    %v215 = vunpack.c.l.b16 %v176
    %v216 = vunpack.c.l.b16 %v177
    %v217 = vunpack.c.l.b16 %v178
    %v218 = vunpack.c.l.b16 %v179
    %v219 = vunpack.c.l.b16 %v180
    %v220 = vunpack.c.l.b16 %v181
    %v221 = vunpack.c.l.b16 %v182
    %v222 = vunpack.c.l.b16 %v183
    %v223 = vpack.c.b16 %v208, %v207
    %v224 = vpack.c.b16 %v210, %v209
    %v225 = vpack.c.b16 %v212, %v211
    %v226 = vpack.c.b16 %v214, %v213
    %v227 = vpack.c.b16 %v216, %v215
    %v228 = vpack.c.b16 %v218, %v217
    %v229 = vpack.c.b16 %v220, %v219
    %v230 = vpack.c.b16 %v222, %v221
    %239 = vmatprep.subr.bf16.mxu0 0
    %240 = vmatpush1.bf16.msra.mxu0 %v230
    %241 = vmatprep.subr.bf16.mxu0 0
    %242 = vmatpush1.bf16.msra.mxu0 %v229
    %243 = vmatprep.subr.bf16.mxu0 0
    %244 = vmatpush1.bf16.msra.mxu0 %v228
    %245 = vmatprep.subr.bf16.mxu0 0
    %246 = vmatpush1.bf16.msra.mxu0 %v227
    %247 = vmatprep.subr.bf16.mxu0 0
    %248 = vmatpush1.bf16.msra.mxu0 %v226
    %249 = vmatprep.subr.bf16.mxu0 0
    %250 = vmatpush1.bf16.msra.mxu0 %v225
    %251 = vmatprep.subr.bf16.mxu0 0
    %252 = vmatpush1.bf16.msra.mxu0 %v224
    %253 = vmatprep.subr.bf16.mxu0 0
    %254 = vmatpush1.bf16.msra.mxu0 %v223
    %255 = vmatprep.subr.bf16.mxu0 0
    %256 = vmatpush2.bf16.msra.mxu0 0
    %257 = vmatprep.subr.bf16.mxu0 0
    %258 = vmatpush2.bf16.msra.mxu0 0
    %259 = vmatprep.subr.bf16.mxu0 0
    %260 = vmatpush2.bf16.msra.mxu0 0
    %261 = vmatprep.subr.bf16.mxu0 0
    %262 = vmatpush2.bf16.msra.mxu0 0
    %263 = vmatprep.subr.bf16.mxu0 0
    %264 = vmatpush2.bf16.msra.mxu0 0
    %265 = vmatprep.subr.bf16.mxu0 0
    %266 = vmatpush2.bf16.msra.mxu0 0
    %267 = vmatprep.subr.bf16.mxu0 0
    %268 = vmatpush2.bf16.msra.mxu0 0
    %269 = vmatprep.subr.bf16.mxu0 0
    %270 = vmatpush2.bf16.msra.mxu0 0
    %271 = vmatprep.mubr.bf16.mxu0 0
    %272 = vmatmul.mubr.bf16.gmra.mxu0 %v167
    %v273 = vpop.f32.mrf.mxu0
    %v274 = vadd.f32 %v189, %v273
    %v275 = vpop.f32.mrf.mxu0
    %v276 = vpop.f32.mrf.mxu0
    %v277 = vpop.f32.mrf.mxu0
    %278 = vdwg.mxu0
    %v279 = vmax.f32 %v274, 0.0
    %280 = vst [vmem:[#allocation8] sm:$0xff] %v279
    // Predicated region
    $region30: #{_ae_forward_impl.1} parent=1 // pred_check
      _
    $region31: #{_ae_forward_impl.1} parent=1 // pred_check_branch
      %282 = sbr.rel (0) target = $region33
    $region32: #{_ae_forward_impl.1} parent=1 // pred_region
      %s284 = ssub.s32 128, 128
      %285 = vsyncadd [#allocation4], %s284
      %s287 = sshll.u32 [#allocation7], 4
      %s288 = int_to_ptr.vmem [resolvable:$true] %s287
      %290 = dma.vmem_to_hbm [thread:$0]  %s288, 128, %s5, [#allocation4]
    $region33: #{_ae_forward_impl.1} parent=1 // pred_fallthru
      _
    // Predicated region
    $region34: #{_ae_forward_impl.1} parent=1 // pred_check
      _
    $region35: #{_ae_forward_impl.1} parent=1 // pred_check_branch
      %292 = sbr.rel (0) target = $region37
    $region36: #{_ae_forward_impl.1} parent=1 // pred_region
      %s294 = ssub.s32 128, 128
      %295 = vsyncadd [#allocation9], %s294
      %s297 = sshll.u32 [#allocation8], 4
      %s298 = int_to_ptr.vmem [resolvable:$true] %s297
      %300 = dma.vmem_to_hbm [thread:$0]  %s298, 128, %s6, [#allocation9]
    $region37: #{_ae_forward_impl.1} parent=1 // pred_fallthru
      _
    // Predicated region
    $region38: #{_ae_forward_impl.1} parent=1 // pred_check
      _
    $region39: #{_ae_forward_impl.1} parent=1 // pred_check_branch
      %302 = sbr.rel (0) target = $region41
    $region40: #{_ae_forward_impl.1} parent=1 // pred_region
      %303 = dma.done [#allocation4], 128
    $region41: #{_ae_forward_impl.1} parent=1 // pred_fallthru
      _
    // Predicated region
    $region42: #{_ae_forward_impl.1} parent=1 // pred_check
      _
    $region43: #{_ae_forward_impl.1} parent=1 // pred_check_branch
      %305 = sbr.rel (0) target = $region45
    $region44: #{_ae_forward_impl.1} parent=1 // pred_region
      %306 = dma.done [#allocation9], 128
    $region45: #{_ae_forward_impl.1} parent=1 // pred_fallthru
      _
    %307 = vsyncpa [#allocation3], 1
    %308 = vsyncpa [#allocation6], 1
    %309 = vsyncpa [#allocation4], 1
    %310 = vsyncpa [#allocation9], 1

</llo_original>
